<compile_context>
chip_gen: v6e
topology: v6e:2x2x1
jax: 0.10.0
libtpu: 0.0.40
codegen_flags: <defaults>
</compile_context>

<pallas_src>
import math

import jax
import jax.numpy as jnp
from jax.experimental import pallas as pl
from jax.experimental.pallas import tpu as pltpu


# ----------------------------- configuration --------------------------------
N = 2                     # batch
C_IN, H, W = 3, 16, 16    # input_shape (C, H, W)
REDUCTION = 4             # backbone.reduction_factor (stand-in)
C_BB = 8                  # backbone.out_channels[-1] (stand-in)
POOL_CHANNELS = 4
FC_HIDDEN = 32
ANCHORS = 8

HP = math.ceil(H / REDUCTION)            # 4 rows in the backbone feature map
WP = math.ceil(W / REDUCTION)            # 4 cols in the backbone feature map
C_CONV = POOL_CHANNELS * HP * WP         # 1x1 conv out channels = 64
FC1 = int(FC_HIDDEN * 1.75)              # 56
FC2 = int(FC_HIDDEN * 1.25)              # 40
FC3 = FC_HIDDEN                          # 32
OUT = ANCHORS * 2 + 1                    # 17

LANES = 128
PIX = N * HP * W                         # 128 H-subsampled pixel columns fed to the conv

# ----------------------- packed-parameter slab layout ------------------------
# Two layers share one 8-aligned row band, side by side in lanes (lane offset 0 / 64):
#   band A (rows   0..63,  64 rows): W_f1   (C_CONV x FC1) @ lanes [0:56)
#                                    W_foldT(C_CONV x C_IN) @ lanes [64:67)
#   band B (rows  64..119, 56 rows): W_f2   (FC1 x FC2)     @ lanes [0:40)
#                                    W_f3   (FC2 x FC3)     @ lanes [64:96)
#   band C (rows 120..151, 32 rows): W_f4   (FC3 x OUT)     @ lanes [0:17)
ROW_A = 0
ROW_B = 64
ROW_C = 120
W_ROWS = 152
B_ROWS = 8
LANE_PAIR = 64
assert ROW_A % 8 == 0 and ROW_B % 8 == 0 and ROW_C % 8 == 0 and W_ROWS % 8 == 0
assert ROW_A + C_CONV <= ROW_B and ROW_B + FC1 <= ROW_C and ROW_C + FC3 == W_ROWS


# ------------------------------ Pallas kernel --------------------------------
def regression_net_kernel(x_ref, w_ref, b_ref, out_ref):
    # x_ref:   (N, C_IN, H, W) raw NCHW input (single contiguous DMA)
    # w_ref:   (W_ROWS, 128)   packed weights
    # b_ref:   (B_ROWS, 128)   packed biases (one row per layer)
    # out_ref: (N, OUT)

    # ---- backbone stand-in spatial subsample along H (rows h = 0, R, 2R, ...) ------
    # TODO(synk): the real ResNet/EfficientNet/MobileNet/DenseNet backbone is not
    # defined in the provided module; this affine stand-in (folded into the 1x1 conv
    # weight at pack time) only matches the feature-map shape / reduction factor of
    # `self.backbone(x)[0]`.
    pieces = []
    for n in range(N):
        for i in range(HP):
            pieces.append(x_ref[n, :, REDUCTION * i, :])          # (C_IN, W) static read
    xw = jnp.concatenate(pieces, axis=1)                          # (C_IN, PIX) lanes=(n,i,w)

    # ---- folded (backbone stand-in o 1x1 conv): out-channels in sublanes -----------
    w_foldT = w_ref[ROW_A:ROW_A + C_CONV, LANE_PAIR:LANE_PAIR + C_IN]     # (C_CONV, C_IN)
    z = jnp.dot(w_foldT, xw, preferred_element_type=jnp.float32)          # (C_CONV, PIX)

    # ---- AdaptiveMaxPool2d((1,1)) over the (HP, WP) subsampled grid -----------------
    # W-axis subsample is done here: only lanes with w % REDUCTION == 0 participate.
    lane = jax.lax.broadcasted_iota(jnp.int32, z.shape, 1)
    keep = ((lane % W) % REDUCTION) == 0
    zm = jnp.where(keep, z, -jnp.inf)
    per_n = HP * W                                                # lanes per batch element
    feaT = jnp.concatenate(
        [jnp.max(zm[:, n * per_n:(n + 1) * per_n], axis=1, keepdims=True)
         for n in range(N)],
        axis=1)                                                   # (C_CONV, N)
    # flatten(start_dim=1); folded conv bias added after the max (max commutes with +b)
    fea = jnp.transpose(feaT, (1, 0)) + b_ref[0:1, :C_CONV]       # (N, C_CONV)

    # ---- fc head (headLinearlayers == 3): 3x (Linear + ReLU) + Linear ---------------
    h = jnp.maximum(
        jnp.dot(fea, w_ref[ROW_A:ROW_A + C_CONV, 0:FC1],
                preferred_element_type=jnp.float32) + b_ref[1:2, :FC1], 0.0)
    h = jnp.maximum(
        jnp.dot(h, w_ref[ROW_B:ROW_B + FC1, 0:FC2],
                preferred_element_type=jnp.float32) + b_ref[2:3, :FC2], 0.0)
    h = jnp.maximum(
        jnp.dot(h, w_ref[ROW_B:ROW_B + FC2, LANE_PAIR:LANE_PAIR + FC3],
                preferred_element_type=jnp.float32) + b_ref[3:4, :FC3], 0.0)
    reg = jnp.dot(h, w_ref[ROW_C:ROW_C + FC3, 0:OUT],
                  preferred_element_type=jnp.float32) + b_ref[4:5, :OUT]

    out_ref[...] = reg.astype(out_ref.dtype)


def regression_net(x_nchw, w_pack, b_pack):
    # No wrapper-side plumbing: raw NCHW tensor goes straight into the kernel.
    assert x_nchw.shape == (N, C_IN, H, W), x_nchw.shape
    vmem = pl.BlockSpec(memory_space=pltpu.MemorySpace.VMEM)
    # Single-shot, no grid: the whole working set (~130 KiB) fits VMEM on v5e/v6e/v7x
    # and the kernel is launch/latency bound.  Only introduce a batch grid with
    # dimension_semantics=("parallel",) (2-TC split on v7x) once N grows to ~16+.
    return pl.pallas_call(
        regression_net_kernel,
        out_shape=jax.ShapeDtypeStruct((N, OUT), jnp.float32),
        in_specs=[vmem, vmem, vmem],
        out_specs=vmem,
    )(x_nchw, w_pack, b_pack)


# ------------------------- parameter initialization --------------------------
def _linear_init(key, fan_in, fan_out):
    """PyTorch-style uniform(-1/sqrt(fan_in), 1/sqrt(fan_in)) init, (in, out) layout."""
    kw, kb = jax.random.split(key)
    bound = 1.0 / math.sqrt(fan_in)
    w = jax.random.uniform(kw, (fan_in, fan_out), jnp.float32, -bound, bound)
    b = jax.random.uniform(kb, (fan_out,), jnp.float32, -bound, bound)
    return w, b


def make_packed_params(key):
    """Init all layers, fold the affine backbone stand-in into the 1x1 conv, and pack
    everything into the two VMEM slabs consumed by the kernel."""
    keys = jax.random.split(key, 6)
    w_bb, b_bb = _linear_init(keys[0], C_IN, C_BB)      # backbone stand-in
    w_cv, b_cv = _linear_init(keys[1], C_BB, C_CONV)    # self.conv (1x1)
    w_f1, b_f1 = _linear_init(keys[2], C_CONV, FC1)
    w_f2, b_f2 = _linear_init(keys[3], FC1, FC2)
    w_f3, b_f3 = _linear_init(keys[4], FC2, FC3)
    w_f4, b_f4 = _linear_init(keys[5], FC3, OUT)

    # Fold: valid only while the stand-in backbone is affine (no activation before conv).
    w_fold = w_bb @ w_cv                                # (C_IN, C_CONV)
    b_fold = b_bb @ w_cv + b_cv                         # (C_CONV,)

    w_pack = jnp.zeros((W_ROWS, LANES), jnp.float32)
    b_pack = jnp.zeros((B_ROWS, LANES), jnp.float32)
    w_pack = w_pack.at[ROW_A:ROW_A + C_CONV, 0:FC1].set(w_f1)
    w_pack = w_pack.at[ROW_A:ROW_A + C_CONV, LANE_PAIR:LANE_PAIR + C_IN].set(w_fold.T)
    w_pack = w_pack.at[ROW_B:ROW_B + FC1, 0:FC2].set(w_f2)
    w_pack = w_pack.at[ROW_B:ROW_B + FC2, LANE_PAIR:LANE_PAIR + FC3].set(w_f3)
    w_pack = w_pack.at[ROW_C:ROW_C + FC3, 0:OUT].set(w_f4)
    b_pack = b_pack.at[0, :C_CONV].set(b_fold)
    b_pack = b_pack.at[1, :FC1].set(b_f1)
    b_pack = b_pack.at[2, :FC2].set(b_f2)
    b_pack = b_pack.at[3, :FC3].set(b_f3)
    b_pack = b_pack.at[4, :OUT].set(b_f4)
    return w_pack, b_pack


# --------------------------------- main --------------------------------------
if __name__ == "__main__":
    key = jax.random.PRNGKey(0)
    k_params, k_x = jax.random.split(key)
    w_pack, b_pack = make_packed_params(k_params)

    x = jax.random.normal(k_x, (N, C_IN, H, W), jnp.float32)   # NCHW, like PyTorch

    reg = regression_net(x, w_pack, b_pack)
    jax.block_until_ready(reg)

    assert reg.shape == (N, OUT), reg.shape
    assert reg.dtype == jnp.float32
    print("KERNEL_OK")
</pallas_src>

<mosaic_0001>
module attributes {stable_mosaic.version = 11 : i64} {
  func.func @regression_net_kernel(%arg0: memref<2x3x16x16xf32, #tpu.memory_space<vmem>>, %arg1: memref<152x128xf32, #tpu.memory_space<vmem>>, %arg2: memref<8x128xf32, #tpu.memory_space<vmem>>, %arg3: memref<2x17xf32, #tpu.memory_space<vmem>>) attributes {dimension_semantics = [], scalar_prefetch = 0 : i64, scratch_operands = 0 : i64, tpu.core_type = #tpu.core_type<tc>} {
    %c0 = arith.constant 0 : index
    %c0_0 = arith.constant 0 : index
    %c0_1 = arith.constant 0 : index
    %c0_2 = arith.constant 0 : index
    %0 = vector.load %arg0[%c0, %c0_0, %c0_1, %c0_2] : memref<2x3x16x16xf32, #tpu.memory_space<vmem>>, vector<1x3x1x16xf32>
    %1 = vector.shape_cast %0 : vector<1x3x1x16xf32> to vector<3x16xf32>
    %c0_3 = arith.constant 0 : index
    %c0_4 = arith.constant 0 : index
    %c4 = arith.constant 4 : index
    %c0_5 = arith.constant 0 : index
    %2 = vector.load %arg0[%c0_3, %c0_4, %c4, %c0_5] : memref<2x3x16x16xf32, #tpu.memory_space<vmem>>, vector<1x3x1x16xf32>
    %3 = vector.shape_cast %2 : vector<1x3x1x16xf32> to vector<3x16xf32>
    %c0_6 = arith.constant 0 : index
    %c0_7 = arith.constant 0 : index
    %c8 = arith.constant 8 : index
    %c0_8 = arith.constant 0 : index
    %4 = vector.load %arg0[%c0_6, %c0_7, %c8, %c0_8] : memref<2x3x16x16xf32, #tpu.memory_space<vmem>>, vector<1x3x1x16xf32>
    %5 = vector.shape_cast %4 : vector<1x3x1x16xf32> to vector<3x16xf32>
    %c0_9 = arith.constant 0 : index
    %c0_10 = arith.constant 0 : index
    %c12 = arith.constant 12 : index
    %c0_11 = arith.constant 0 : index
    %6 = vector.load %arg0[%c0_9, %c0_10, %c12, %c0_11] : memref<2x3x16x16xf32, #tpu.memory_space<vmem>>, vector<1x3x1x16xf32>
    %7 = vector.shape_cast %6 : vector<1x3x1x16xf32> to vector<3x16xf32>
    %c1 = arith.constant 1 : index
    %c0_12 = arith.constant 0 : index
    %c0_13 = arith.constant 0 : index
    %c0_14 = arith.constant 0 : index
    %8 = vector.load %arg0[%c1, %c0_12, %c0_13, %c0_14] : memref<2x3x16x16xf32, #tpu.memory_space<vmem>>, vector<1x3x1x16xf32>
    %9 = vector.shape_cast %8 : vector<1x3x1x16xf32> to vector<3x16xf32>
    %c1_15 = arith.constant 1 : index
    %c0_16 = arith.constant 0 : index
    %c4_17 = arith.constant 4 : index
    %c0_18 = arith.constant 0 : index
    %10 = vector.load %arg0[%c1_15, %c0_16, %c4_17, %c0_18] : memref<2x3x16x16xf32, #tpu.memory_space<vmem>>, vector<1x3x1x16xf32>
    %11 = vector.shape_cast %10 : vector<1x3x1x16xf32> to vector<3x16xf32>
    %c1_19 = arith.constant 1 : index
    %c0_20 = arith.constant 0 : index
    %c8_21 = arith.constant 8 : index
    %c0_22 = arith.constant 0 : index
    %12 = vector.load %arg0[%c1_19, %c0_20, %c8_21, %c0_22] : memref<2x3x16x16xf32, #tpu.memory_space<vmem>>, vector<1x3x1x16xf32>
    %13 = vector.shape_cast %12 : vector<1x3x1x16xf32> to vector<3x16xf32>
    %c1_23 = arith.constant 1 : index
    %c0_24 = arith.constant 0 : index
    %c12_25 = arith.constant 12 : index
    %c0_26 = arith.constant 0 : index
    %14 = vector.load %arg0[%c1_23, %c0_24, %c12_25, %c0_26] : memref<2x3x16x16xf32, #tpu.memory_space<vmem>>, vector<1x3x1x16xf32>
    %15 = vector.shape_cast %14 : vector<1x3x1x16xf32> to vector<3x16xf32>
    %16 = tpu.concatenate %1, %3, %5, %7, %9, %11, %13, %15 in 1 : vector<3x16xf32>, vector<3x16xf32>, vector<3x16xf32>, vector<3x16xf32>, vector<3x16xf32>, vector<3x16xf32>, vector<3x16xf32>, vector<3x16xf32> -> vector<3x128xf32>
    %c0_27 = arith.constant 0 : index
    %c64 = arith.constant 64 : index
    %17 = vector.load %arg1[%c0_27, %c64] : memref<152x128xf32, #tpu.memory_space<vmem>>, vector<64x3xf32>
    %cst = arith.constant dense<0.000000e+00> : vector<64x128xf32>
    %18 = tpu.matmul %17, %16, %cst {dimension_numbers = #tpu.dot_dimension_numbers<[1], [0], [0], [1], [0, 0, 1, 1], [], []>} : vector<64x3xf32>, vector<3x128xf32>, vector<64x128xf32> -> vector<64x128xf32>
    %19 = tpu.iota {dimensions = array<i32: 1>} : vector<64x128xi32>
    %c16_i32 = arith.constant 16 : i32
    %c0_i32 = arith.constant 0 : i32
    %20 = arith.cmpi eq, %c16_i32, %c0_i32 : i32
    %c1_i32 = arith.constant 1 : i32
    %21 = arith.select %20, %c1_i32, %c16_i32 : i32
    %22 = vector.broadcast %21 : i32 to vector<64x128xi32>
    %23 = arith.remsi %19, %22 : vector<64x128xi32>
    %c0_i32_28 = arith.constant 0 : i32
    %24 = vector.broadcast %c0_i32_28 : i32 to vector<64x128xi32>
    %25 = arith.cmpi ne, %23, %24 : vector<64x128xi32>
    %c0_i32_29 = arith.constant 0 : i32
    %26 = vector.broadcast %c0_i32_29 : i32 to vector<64x128xi32>
    %27 = arith.cmpi slt, %23, %26 : vector<64x128xi32>
    %c0_i32_30 = arith.constant 0 : i32
    %28 = arith.cmpi slt, %21, %c0_i32_30 : i32
    %29 = vector.broadcast %28 : i1 to vector<64x128xi1>
    %30 = vector.broadcast %29 : vector<64x128xi1> to vector<64x128xi1>
    %31 = arith.xori %27, %30 : vector<64x128xi1>
    %32 = arith.andi %31, %25 : vector<64x128xi1>
    %33 = vector.broadcast %21 : i32 to vector<64x128xi32>
    %34 = arith.addi %23, %33 : vector<64x128xi32>
    %35 = arith.select %32, %34, %23 : vector<64x128xi1>, vector<64x128xi32>
    %c4_i32 = arith.constant 4 : i32
    %c0_i32_31 = arith.constant 0 : i32
    %36 = arith.cmpi eq, %c4_i32, %c0_i32_31 : i32
    %c1_i32_32 = arith.constant 1 : i32
    %37 = arith.select %36, %c1_i32_32, %c4_i32 : i32
    %38 = vector.broadcast %37 : i32 to vector<64x128xi32>
    %39 = arith.remsi %35, %38 : vector<64x128xi32>
    %c0_i32_33 = arith.constant 0 : i32
    %40 = vector.broadcast %c0_i32_33 : i32 to vector<64x128xi32>
    %41 = arith.cmpi ne, %39, %40 : vector<64x128xi32>
    %c0_i32_34 = arith.constant 0 : i32
    %42 = vector.broadcast %c0_i32_34 : i32 to vector<64x128xi32>
    %43 = arith.cmpi slt, %39, %42 : vector<64x128xi32>
    %c0_i32_35 = arith.constant 0 : i32
    %44 = arith.cmpi slt, %37, %c0_i32_35 : i32
    %45 = vector.broadcast %44 : i1 to vector<64x128xi1>
    %46 = vector.broadcast %45 : vector<64x128xi1> to vector<64x128xi1>
    %47 = arith.xori %43, %46 : vector<64x128xi1>
    %48 = arith.andi %47, %41 : vector<64x128xi1>
    %49 = vector.broadcast %37 : i32 to vector<64x128xi32>
    %50 = arith.addi %39, %49 : vector<64x128xi32>
    %51 = arith.select %48, %50, %39 : vector<64x128xi1>, vector<64x128xi32>
    %c0_i32_36 = arith.constant 0 : i32
    %52 = vector.broadcast %c0_i32_36 : i32 to vector<64x128xi32>
    %53 = arith.cmpi eq, %51, %52 : vector<64x128xi32>
    %cst_37 = arith.constant 0xFF800000 : f32
    %54 = vector.broadcast %cst_37 : f32 to vector<64x128xf32>
    %55 = arith.select %53, %18, %54 : vector<64x128xi1>, vector<64x128xf32>
    %56 = vector.extract_strided_slice %55 {offsets = [0, 0], sizes = [64, 64], strides = [1, 1]} : vector<64x128xf32> to vector<64x64xf32>
    %cst_38 = arith.constant dense<0xFF800000> : vector<64xf32>
    %57 = vector.multi_reduction <maximumf>, %56, %cst_38 [1] : vector<64x64xf32> to vector<64xf32>
    %58 = vector.shape_cast %57 : vector<64xf32> to vector<64x1xf32>
    %59 = vector.extract_strided_slice %55 {offsets = [0, 64], sizes = [64, 64], strides = [1, 1]} : vector<64x128xf32> to vector<64x64xf32>
    %cst_39 = arith.constant dense<0xFF800000> : vector<64xf32>
    %60 = vector.multi_reduction <maximumf>, %59, %cst_39 [1] : vector<64x64xf32> to vector<64xf32>
    %61 = vector.shape_cast %60 : vector<64xf32> to vector<64x1xf32>
    %62 = tpu.concatenate %58, %61 in 1 : vector<64x1xf32>, vector<64x1xf32> -> vector<64x2xf32>
    %63 = tpu.transpose %62, [1, 0] : vector<64x2xf32> -> vector<2x64xf32>
    %c0_40 = arith.constant 0 : index
    %c0_41 = arith.constant 0 : index
    %64 = vector.load %arg2[%c0_40, %c0_41] : memref<8x128xf32, #tpu.memory_space<vmem>>, vector<1x64xf32>
    %65 = vector.broadcast %64 : vector<1x64xf32> to vector<2x64xf32>
    %66 = arith.addf %63, %65 : vector<2x64xf32>
    %c0_42 = arith.constant 0 : index
    %c0_43 = arith.constant 0 : index
    %67 = vector.load %arg1[%c0_42, %c0_43] : memref<152x128xf32, #tpu.memory_space<vmem>>, vector<64x56xf32>
    %cst_44 = arith.constant dense<0.000000e+00> : vector<2x56xf32>
    %68 = tpu.matmul %66, %67, %cst_44 {dimension_numbers = #tpu.dot_dimension_numbers<[1], [0], [0], [1], [0, 0, 1, 1], [], []>} : vector<2x64xf32>, vector<64x56xf32>, vector<2x56xf32> -> vector<2x56xf32>
    %c1_45 = arith.constant 1 : index
    %c0_46 = arith.constant 0 : index
    %69 = vector.load %arg2[%c1_45, %c0_46] : memref<8x128xf32, #tpu.memory_space<vmem>>, vector<1x56xf32>
    %70 = vector.broadcast %69 : vector<1x56xf32> to vector<2x56xf32>
    %71 = arith.addf %68, %70 : vector<2x56xf32>
    %cst_47 = arith.constant 0.000000e+00 : f32
    %72 = vector.broadcast %cst_47 : f32 to vector<2x56xf32>
    %73 = arith.maximumf %71, %72 : vector<2x56xf32>
    %c64_48 = arith.constant 64 : index
    %c0_49 = arith.constant 0 : index
    %74 = vector.load %arg1[%c64_48, %c0_49] : memref<152x128xf32, #tpu.memory_space<vmem>>, vector<56x40xf32>
    %cst_50 = arith.constant dense<0.000000e+00> : vector<2x40xf32>
    %75 = tpu.matmul %73, %74, %cst_50 {dimension_numbers = #tpu.dot_dimension_numbers<[1], [0], [0], [1], [0, 0, 1, 1], [], []>} : vector<2x56xf32>, vector<56x40xf32>, vector<2x40xf32> -> vector<2x40xf32>
    %c2 = arith.constant 2 : index
    %c0_51 = arith.constant 0 : index
    %76 = vector.load %arg2[%c2, %c0_51] : memref<8x128xf32, #tpu.memory_space<vmem>>, vector<1x40xf32>
    %77 = vector.broadcast %76 : vector<1x40xf32> to vector<2x40xf32>
    %78 = arith.addf %75, %77 : vector<2x40xf32>
    %cst_52 = arith.constant 0.000000e+00 : f32
    %79 = vector.broadcast %cst_52 : f32 to vector<2x40xf32>
    %80 = arith.maximumf %78, %79 : vector<2x40xf32>
    %c64_53 = arith.constant 64 : index
    %c64_54 = arith.constant 64 : index
    %81 = vector.load %arg1[%c64_53, %c64_54] : memref<152x128xf32, #tpu.memory_space<vmem>>, vector<40x32xf32>
    %cst_55 = arith.constant dense<0.000000e+00> : vector<2x32xf32>
    %82 = tpu.matmul %80, %81, %cst_55 {dimension_numbers = #tpu.dot_dimension_numbers<[1], [0], [0], [1], [0, 0, 1, 1], [], []>} : vector<2x40xf32>, vector<40x32xf32>, vector<2x32xf32> -> vector<2x32xf32>
    %c3 = arith.constant 3 : index
    %c0_56 = arith.constant 0 : index
    %83 = vector.load %arg2[%c3, %c0_56] : memref<8x128xf32, #tpu.memory_space<vmem>>, vector<1x32xf32>
    %84 = vector.broadcast %83 : vector<1x32xf32> to vector<2x32xf32>
    %85 = arith.addf %82, %84 : vector<2x32xf32>
    %cst_57 = arith.constant 0.000000e+00 : f32
    %86 = vector.broadcast %cst_57 : f32 to vector<2x32xf32>
    %87 = arith.maximumf %85, %86 : vector<2x32xf32>
    %c120 = arith.constant 120 : index
    %c0_58 = arith.constant 0 : index
    %88 = vector.load %arg1[%c120, %c0_58] : memref<152x128xf32, #tpu.memory_space<vmem>>, vector<32x17xf32>
    %cst_59 = arith.constant dense<0.000000e+00> : vector<2x17xf32>
    %89 = tpu.matmul %87, %88, %cst_59 {dimension_numbers = #tpu.dot_dimension_numbers<[1], [0], [0], [1], [0, 0, 1, 1], [], []>} : vector<2x32xf32>, vector<32x17xf32>, vector<2x17xf32> -> vector<2x17xf32>
    %c4_60 = arith.constant 4 : index
    %c0_61 = arith.constant 0 : index
    %90 = vector.load %arg2[%c4_60, %c0_61] : memref<8x128xf32, #tpu.memory_space<vmem>>, vector<1x17xf32>
    %91 = vector.broadcast %90 : vector<1x17xf32> to vector<2x17xf32>
    %92 = arith.addf %89, %91 : vector<2x17xf32>
    %c0_62 = arith.constant 0 : index
    %c0_63 = arith.constant 0 : index
    %93 = vector.load %arg3[%c0_62, %c0_63] : memref<2x17xf32, #tpu.memory_space<vmem>>, vector<2x17xf32>
    tpu.vector_store %arg3[%c0_62, %c0_63], %92 {strides = array<i32>} : memref<2x17xf32, #tpu.memory_space<vmem>>, vector<2x17xf32>,
    return
  }
}

</mosaic_0001>

<llo_original>
// kernel: tpu_custom_call.1
$region0: #{tpu_custom_call.1}
  #allocation0 [shape = 'u32[]', space=smem, size = 0x4, offset = 0x4, fixed_abs, tag = 'smem constant byte address 0x4 - core index']
  #allocation1 [shape = 'u32[144,128]{1,0:T(1,128)}', space=vmem, size = 0x12000, scoped, tag = 'internal scratch']
  %s0 = inlined_call_operand.hbm [shape: f32[2,3,16,16], index: 0, kind: input, shape index: {}]
  %s1 = inlined_call_operand.hbm [shape: f32[152,128], index: 1, kind: input, shape index: {}]
  %s2 = inlined_call_operand.hbm [shape: f32[8,128], index: 2, kind: input, shape index: {}]
  %s3 = inlined_call_operand.hbm [shape: f32[2,17], index: 3, kind: output, shape index: {}]
  %s4 = sld [smem:[#allocation0]]
  $region34: #{tpu_custom_call.1} parent=0
    _
  %s6 = ssub.s32 1, %s4
  %s7 = scalar_select 0, %s6, %s4
  $region1: #{tpu_custom_call.1} parent=0
    #allocation2 [shape = 'u8[49152]{0}', space=vmem, size = 0xc000, scoped, tag = 'input window, operand 0, single buffered']
    #allocation3 [shape = 's32[1]{0}', space=sflag, size = 0x4, scoped, tag = 'scoped memory for tpu_custom_call.1']
    #allocation4 [shape = 's32[1]{0}', space=sflag, size = 0x4, scoped, tag = 'scoped memory for tpu_custom_call.1']
    #allocation5 [shape = 'u8[77824]{0}', space=vmem, size = 0x13000, scoped, tag = 'input window, operand 1, single buffered']
    #allocation6 [shape = 's32[1]{0}', space=sflag, size = 0x4, scoped, tag = 'scoped memory for tpu_custom_call.1']
    #allocation7 [shape = 'u8[4096]{0}', space=vmem, size = 0x1000, scoped, tag = 'input window, operand 2, single buffered']
    #allocation8 [shape = 'u8[1024]{0}', space=vmem, size = 0x400, scoped, tag = 'output window, operand 0, single buffered']
    %8 = vsyncpa [#allocation3], 0
    %9 = vsyncpa [#allocation6], 0
    %10 = vsyncpa [#allocation4], 0
    // Predicated region
    $region2: #{tpu_custom_call.1} parent=1 // pred_check
      _
    $region3: #{tpu_custom_call.1} parent=1 // pred_check_branch
      %12 = sbr.rel (0) target = $region5
    $region4: #{tpu_custom_call.1} parent=1 // pred_region
      %s14 = ssub.s32 1536, 1536
      %15 = vsyncadd [#allocation3], %s14
      %s16 = sshll.u32 [#allocation2], 4
      %s17 = int_to_ptr.vmem [resolvable:$true] %s16
      %22 = dma.hbm_to_vmem [thread:$0]  %s0, 1536, %s17, [#allocation3], 128, 128, 8
    $region5: #{tpu_custom_call.1} parent=1 // pred_fallthru
      _
    // Predicated region
    $region6: #{tpu_custom_call.1} parent=1 // pred_check
      _
    $region7: #{tpu_custom_call.1} parent=1 // pred_check_branch
      %24 = sbr.rel (0) target = $region9
    $region8: #{tpu_custom_call.1} parent=1 // pred_region
      %s26 = ssub.s32 2432, 2432
      %27 = vsyncadd [#allocation6], %s26
      %s28 = sshll.u32 [#allocation5], 4
      %s29 = int_to_ptr.vmem [resolvable:$true] %s28
      %34 = dma.hbm_to_vmem [thread:$0]  %s1, 2432, %s29, [#allocation6], 128, 128, 8
    $region9: #{tpu_custom_call.1} parent=1 // pred_fallthru
      _
    // Predicated region
    $region10: #{tpu_custom_call.1} parent=1 // pred_check
      _
    $region11: #{tpu_custom_call.1} parent=1 // pred_check_branch
      %36 = sbr.rel (0) target = $region13
    $region12: #{tpu_custom_call.1} parent=1 // pred_region
      %s38 = ssub.s32 128, 128
      %39 = vsyncadd [#allocation6], %s38
      %s41 = sshll.u32 [#allocation7], 4
      %s42 = int_to_ptr.vmem [resolvable:$true] %s41
      %44 = dma.hbm_to_vmem [thread:$0]  %s2, 128, %s42, [#allocation6]
    $region13: #{tpu_custom_call.1} parent=1 // pred_fallthru
      _
    // Predicated region
    $region14: #{tpu_custom_call.1} parent=1 // pred_check
      _
    $region15: #{tpu_custom_call.1} parent=1 // pred_check_branch
      %46 = sbr.rel (0) target = $region17
    $region16: #{tpu_custom_call.1} parent=1 // pred_region
      %47 = dma.done [#allocation3], 1536
    $region17: #{tpu_custom_call.1} parent=1 // pred_fallthru
      _
    // Predicated region
    $region18: #{tpu_custom_call.1} parent=1 // pred_check
      _
    $region19: #{tpu_custom_call.1} parent=1 // pred_check_branch
      %49 = sbr.rel (0) target = $region21
    $region20: #{tpu_custom_call.1} parent=1 // pred_region
      %50 = dma.done [#allocation6], 2432
    $region21: #{tpu_custom_call.1} parent=1 // pred_fallthru
      _
    // Predicated region
    $region22: #{tpu_custom_call.1} parent=1 // pred_check
      _
    $region23: #{tpu_custom_call.1} parent=1 // pred_check_branch
      %52 = sbr.rel (0) target = $region25
    $region24: #{tpu_custom_call.1} parent=1 // pred_region
      %53 = dma.done [#allocation6], 128
    $region25: #{tpu_custom_call.1} parent=1 // pred_fallthru
      _
    %v54 = vld [vmem:[#allocation2] sm:$0x1]
    %v55 = vld [vmem:[#allocation2 + $0x10] sm:$0x1]
    %v56 = vld [vmem:[#allocation2 + $0x20] sm:$0x1]
    %v57 = vld [vmem:[#allocation2 + $0x4] sm:$0x1]
    %v58 = vld [vmem:[#allocation2 + $0x14] sm:$0x1]
    %v59 = vld [vmem:[#allocation2 + $0x24] sm:$0x1]
    %v60 = vld [vmem:[#allocation2 + $0x8] sm:$0x1]
    %v61 = vld [vmem:[#allocation2 + $0x18] sm:$0x1]
    %v62 = vld [vmem:[#allocation2 + $0x28] sm:$0x1]
    %v63 = vld [vmem:[#allocation2 + $0xc] sm:$0x1]
    %v64 = vld [vmem:[#allocation2 + $0x1c] sm:$0x1]
    %v65 = vld [vmem:[#allocation2 + $0x2c] sm:$0x1]
    %s66 = scalar_lea.vmem [#allocation2], 48
    %v67 = vld [vmem:[%s66] sm:$0x1]
    %v68 = vld [vmem:[%s66 + $0x10] sm:$0x1]
    %v69 = vld [vmem:[%s66 + $0x20] sm:$0x1]
    %v70 = vld [vmem:[%s66 + $0x4] sm:$0x1]
    %v71 = vld [vmem:[%s66 + $0x14] sm:$0x1]
    %v72 = vld [vmem:[%s66 + $0x24] sm:$0x1]
    %v73 = vld [vmem:[%s66 + $0x8] sm:$0x1]
    %v74 = vld [vmem:[%s66 + $0x18] sm:$0x1]
    %v75 = vld [vmem:[%s66 + $0x28] sm:$0x1]
    %v76 = vld [vmem:[%s66 + $0xc] sm:$0x1]
    %v77 = vld [vmem:[%s66 + $0x1c] sm:$0x1]
    %v78 = vld [vmem:[%s66 + $0x2c] sm:$0x1]
    %v82 = vrot.slane %v55, 7
    %vm83 = vcmask 1041409
    %v84 = vsel %vm83, %v82, %v54
    %v85 = vrot.slane %v56, 6
    %vm86 = vcmask 1042434
    %v87 = vsel %vm86, %v85, %v84
    %v92 = vrot.slane %v58, 7
    %v93 = vsel %vm83, %v92, %v57
    %v94 = vrot.slane %v59, 6
    %v95 = vsel %vm86, %v94, %v93
    %96 = vrot.lane.b32.xlu0 %v95, 16
    %v97 = vpop.permute.xlu0 %96
    %v102 = vrot.slane %v61, 7
    %v103 = vsel %vm83, %v102, %v60
    %v104 = vrot.slane %v62, 6
    %v105 = vsel %vm86, %v104, %v103
    %106 = vrot.lane.b32.xlu0 %v105, 32
    %v107 = vpop.permute.xlu0 %106
    %v112 = vrot.slane %v64, 7
    %v113 = vsel %vm83, %v112, %v63
    %v114 = vrot.slane %v65, 6
    %v115 = vsel %vm86, %v114, %v113
    %116 = vrot.lane.b32.xlu0 %v115, 48
    %v117 = vpop.permute.xlu0 %116
    %v122 = vrot.slane %v68, 7
    %v123 = vsel %vm83, %v122, %v67
    %v124 = vrot.slane %v69, 6
    %v125 = vsel %vm86, %v124, %v123
    %126 = vrot.lane.b32.xlu0 %v125, 64
    %v127 = vpop.permute.xlu0 %126
    %v132 = vrot.slane %v71, 7
    %v133 = vsel %vm83, %v132, %v70
    %v134 = vrot.slane %v72, 6
    %v135 = vsel %vm86, %v134, %v133
    %136 = vrot.lane.b32.xlu0 %v135, 80
    %v137 = vpop.permute.xlu0 %136
    %v142 = vrot.slane %v74, 7
    %v143 = vsel %vm83, %v142, %v73
    %v144 = vrot.slane %v75, 6
    %v145 = vsel %vm86, %v144, %v143
    %146 = vrot.lane.b32.xlu0 %v145, 96
    %v147 = vpop.permute.xlu0 %146
    %v152 = vrot.slane %v77, 7
    %v153 = vsel %vm83, %v152, %v76
    %v154 = vrot.slane %v78, 6
    %v155 = vsel %vm86, %v154, %v153
    %156 = vrot.lane.b32.xlu0 %v155, 112
    %v157 = vpop.permute.xlu0 %156
    %vm159 = vcmask 130048
    %v160 = vsel %vm159, %v87, %v97
    %vm161 = vcmask 261120
    %v162 = vsel %vm161, %v160, %v107
    %vm163 = vcmask 392192
    %v164 = vsel %vm163, %v162, %v117
    %vm165 = vcmask 523264
    %v166 = vsel %vm165, %v164, %v127
    %vm167 = vcmask 654336
    %v168 = vsel %vm167, %v166, %v137
    %vm169 = vcmask 785408
    %v170 = vsel %vm169, %v168, %v147
    %vm171 = vcmask 916480
    %v172 = vsel %vm171, %v170, %v157
    %v173 = vld [vmem:[#allocation5] sm:$0xff]
    %v174 = vld [vmem:[#allocation5 + $0x8] sm:$0xff]
    %v175 = vld [vmem:[#allocation5 + $0x10] sm:$0xff]
    %v176 = vld [vmem:[#allocation5 + $0x18] sm:$0xff]
    %v177 = vld [vmem:[#allocation5 + $0x20] sm:$0xff]
    %v178 = vld [vmem:[#allocation5 + $0x28] sm:$0xff]
    %v179 = vld [vmem:[#allocation5 + $0x30] sm:$0xff]
    %v180 = vld [vmem:[#allocation5 + $0x38] sm:$0xff]
    %189 = vrot.lane.b32.xlu0 %v173, 64
    %v190 = vpop.permute.xlu0 %189
    %191 = vrot.lane.b32.xlu0 %v174, 64
    %v192 = vpop.permute.xlu0 %191
    %193 = vrot.lane.b32.xlu0 %v175, 64
    %v194 = vpop.permute.xlu0 %193
    %195 = vrot.lane.b32.xlu0 %v176, 64
    %v196 = vpop.permute.xlu0 %195
    %197 = vrot.lane.b32.xlu0 %v177, 64
    %v198 = vpop.permute.xlu0 %197
    %199 = vrot.lane.b32.xlu0 %v178, 64
    %v200 = vpop.permute.xlu0 %199
    %201 = vrot.lane.b32.xlu0 %v179, 64
    %v202 = vpop.permute.xlu0 %201
    %203 = vrot.lane.b32.xlu0 %v180, 64
    %v204 = vpop.permute.xlu0 %203
    %vm205 = vcmask 23552
    %v206 = vsel %vm205, %v190, 0
    %v208 = vsel %vm205, %v192, 0
    %v210 = vsel %vm205, %v194, 0
    %v212 = vsel %vm205, %v196, 0
    %v214 = vsel %vm205, %v198, 0
    %v216 = vsel %vm205, %v200, 0
    %v218 = vsel %vm205, %v202, 0
    %v220 = vsel %vm205, %v204, 0
    %vm222 = vcmask 1042432
    %v224 = vsel %vm222, %v172, 0
    %226 = vmatprep.subr.mxu0 0.0
    %227 = vmatpush1.msra.mxu0 0.0
    %228 = vmatprep.subr.mxu0 0.0
    %229 = vmatpush1.msra.mxu0 0.0
    %230 = vmatprep.subr.mxu0 0.0
    %231 = vmatpush1.msra.mxu0 0.0
    %232 = vmatprep.subr.mxu0 0.0
    %233 = vmatpush1.msra.mxu0 0.0
    %234 = vmatprep.subr.mxu0 0.0
    %235 = vmatpush1.msra.mxu0 0.0
    %236 = vmatprep.subr.mxu0 0.0
    %237 = vmatpush1.msra.mxu0 0.0
    %238 = vmatprep.subr.mxu0 0.0
    %239 = vmatpush1.msra.mxu0 0.0
    %240 = vmatprep.subr.mxu0 0.0
    %241 = vmatpush1.msra.mxu0 0.0
    %242 = vmatprep.subr.mxu0 0.0
    %243 = vmatpush1.msra.mxu0 0.0
    %244 = vmatprep.subr.mxu0 0.0
    %245 = vmatpush1.msra.mxu0 0.0
    %246 = vmatprep.subr.mxu0 0.0
    %247 = vmatpush1.msra.mxu0 0.0
    %248 = vmatprep.subr.mxu0 0.0
    %249 = vmatpush1.msra.mxu0 0.0
    %250 = vmatprep.subr.mxu0 0.0
    %251 = vmatpush1.msra.mxu0 0.0
    %252 = vmatprep.subr.mxu0 0.0
    %253 = vmatpush1.msra.mxu0 0.0
    %254 = vmatprep.subr.mxu0 0.0
    %255 = vmatpush1.msra.mxu0 0.0
    %256 = vmatprep.subr.mxu0 0.0
    %257 = vmatpush1.msra.mxu0 %v224
    %258 = vmatprep.subr.mxu0 0.0
    %259 = vmatpush2.msra.mxu0 0.0
    %260 = vmatprep.subr.mxu0 0.0
    %261 = vmatpush2.msra.mxu0 0.0
    %262 = vmatprep.subr.mxu0 0.0
    %263 = vmatpush2.msra.mxu0 0.0
    %264 = vmatprep.subr.mxu0 0.0
    %265 = vmatpush2.msra.mxu0 0.0
    %266 = vmatprep.subr.mxu0 0.0
    %267 = vmatpush2.msra.mxu0 0.0
    %268 = vmatprep.subr.mxu0 0.0
    %269 = vmatpush2.msra.mxu0 0.0
    %270 = vmatprep.subr.mxu0 0.0
    %271 = vmatpush2.msra.mxu0 0.0
    %272 = vmatprep.subr.mxu0 0.0
    %273 = vmatpush2.msra.mxu0 0.0
    %274 = vmatprep.subr.mxu0 0.0
    %275 = vmatpush2.msra.mxu0 0.0
    %276 = vmatprep.subr.mxu0 0.0
    %277 = vmatpush2.msra.mxu0 0.0
    %278 = vmatprep.subr.mxu0 0.0
    %279 = vmatpush2.msra.mxu0 0.0
    %280 = vmatprep.subr.mxu0 0.0
    %281 = vmatpush2.msra.mxu0 0.0
    %282 = vmatprep.subr.mxu0 0.0
    %283 = vmatpush2.msra.mxu0 0.0
    %284 = vmatprep.subr.mxu0 0.0
    %285 = vmatpush2.msra.mxu0 0.0
    %286 = vmatprep.subr.mxu0 0.0
    %287 = vmatpush2.msra.mxu0 0.0
    %288 = vmatprep.subr.mxu0 0.0
    %289 = vmatpush2.msra.mxu0 0.0
    %290 = vmatprep.mubr.f32.mxu0 0.0
    %291 = vmatmul.mubr.f32.gmra.mxu0 %v206
    %v292 = vpop.f32.mrf.mxu0
    %v293 = vadd.f32 0.0, %v292
    %v294 = vpop.f32.mrf.mxu0
    %295 = vmatprep.mubr.f32.mxu0 0.0
    %296 = vmatmul.mubr.f32.gmra.mxu0 %v208
    %v297 = vpop.f32.mrf.mxu0
    %v298 = vadd.f32 0.0, %v297
    %v299 = vpop.f32.mrf.mxu0
    %300 = vmatprep.mubr.f32.mxu0 0.0
    %301 = vmatmul.mubr.f32.gmra.mxu0 %v210
    %v302 = vpop.f32.mrf.mxu0
    %v303 = vadd.f32 0.0, %v302
    %v304 = vpop.f32.mrf.mxu0
    %305 = vmatprep.mubr.f32.mxu0 0.0
    %306 = vmatmul.mubr.f32.gmra.mxu0 %v212
    %v307 = vpop.f32.mrf.mxu0
    %v308 = vadd.f32 0.0, %v307
    %v309 = vpop.f32.mrf.mxu0
    %310 = vmatprep.mubr.f32.mxu0 0.0
    %311 = vmatmul.mubr.f32.gmra.mxu0 %v214
    %v312 = vpop.f32.mrf.mxu0
    %v313 = vadd.f32 0.0, %v312
    %v314 = vpop.f32.mrf.mxu0
    %315 = vmatprep.mubr.f32.mxu0 0.0
    %316 = vmatmul.mubr.f32.gmra.mxu0 %v216
    %v317 = vpop.f32.mrf.mxu0
    %v318 = vadd.f32 0.0, %v317
    %v319 = vpop.f32.mrf.mxu0
    %320 = vmatprep.mubr.f32.mxu0 0.0
    %321 = vmatmul.mubr.f32.gmra.mxu0 %v218
    %v322 = vpop.f32.mrf.mxu0
    %v323 = vadd.f32 0.0, %v322
    %v324 = vpop.f32.mrf.mxu0
    %325 = vmatprep.mubr.f32.mxu0 0.0
    %326 = vmatmul.mubr.f32.gmra.mxu0 %v220
    %v327 = vpop.f32.mrf.mxu0
    %v328 = vadd.f32 0.0, %v327
    %v329 = vpop.f32.mrf.mxu0
    %330 = vdwg.mxu0
    %v331 = vlaneseq
    %v332 = vand.u32 %v331, 127
    %vm333 = vcmp.lt.s32.totalorder %v332, 0
    %v334 = vsub.s32 0, %v332
    %v335 = vsel %vm333, %v334, %v332
    %v336 = vshrl.u32 %v335, 4
    %v337 = vand.u32 %v335, 15
    %v338 = vsub.s32 0, %v337
    %v339 = vsel %vm333, %v338, %v337
    %vm340 = vcmp.ne.s32.totalorder %v339, 0
    %vm341 = vcmp.lt.s32.totalorder %v339, 0
    %vm342 = vmand %vm341, %vm340
    %v343 = vadd.s32 %v339, 16
    %v344 = vsel %vm342, %v343, %v339
    %vm345 = vcmp.lt.s32.totalorder %v344, 0
    %v346 = vsub.s32 0, %v344
    %v347 = vsel %vm345, %v346, %v344
    %v348 = vshrl.u32 %v347, 2
    %v349 = vand.u32 %v347, 3
    %v350 = vsub.s32 0, %v349
    %v351 = vsel %vm345, %v350, %v349
    %vm352 = vcmp.ne.s32.totalorder %v351, 0
    %vm353 = vcmp.lt.s32.totalorder %v351, 0
    %vm354 = vmand %vm353, %vm352
    %v355 = vadd.s32 %v351, 4
    %v356 = vsel %vm354, %v355, %v351
    %vm357 = vcmp.eq.s32.totalorder %v356, 0
    %v358 = vsel %vm357, %v293, -inf
    %v359 = vsel %vm357, %v298, -inf
    %v360 = vsel %vm357, %v303, -inf
    %v361 = vsel %vm357, %v308, -inf
    %v362 = vsel %vm357, %v313, -inf
    %v363 = vsel %vm357, %v318, -inf
    %v364 = vsel %vm357, %v323, -inf
    %v365 = vsel %vm357, %v328, -inf
    %v366 = vsel %vm165, %v358, -inf
    %367 = vmax.xlane.f32.xlu0 %v366
    %v368 = vpop.xlane.xlu0 %367
    %v369 = vsel %vm165, %v359, -inf
    %370 = vmax.xlane.f32.xlu0 %v369
    %v371 = vpop.xlane.xlu0 %370
    %v372 = vsel %vm165, %v360, -inf
    %373 = vmax.xlane.f32.xlu0 %v372
    %v374 = vpop.xlane.xlu0 %373
    %v375 = vsel %vm165, %v361, -inf
    %376 = vmax.xlane.f32.xlu0 %v375
    %v377 = vpop.xlane.xlu0 %376
    %v378 = vsel %vm165, %v362, -inf
    %379 = vmax.xlane.f32.xlu0 %v378
    %v380 = vpop.xlane.xlu0 %379
    %v381 = vsel %vm165, %v363, -inf
    %382 = vmax.xlane.f32.xlu0 %v381
    %v383 = vpop.xlane.xlu0 %382
    %v384 = vsel %vm165, %v364, -inf
    %385 = vmax.xlane.f32.xlu0 %v384
    %v386 = vpop.xlane.xlu0 %385
    %v387 = vsel %vm165, %v365, -inf
    %388 = vmax.xlane.f32.xlu0 %v387
    %v389 = vpop.xlane.xlu0 %388
    %vm390 = vcmask 1048064
    %v391 = vsel %vm390, %v358, -inf
    %392 = vmax.xlane.f32.xlu0 %v391
    %v393 = vpop.xlane.xlu0 %392
    %v394 = vsel %vm390, %v359, -inf
    %395 = vmax.xlane.f32.xlu0 %v394
    %v396 = vpop.xlane.xlu0 %395
    %v397 = vsel %vm390, %v360, -inf
    %398 = vmax.xlane.f32.xlu0 %v397
    %v399 = vpop.xlane.xlu0 %398
    %v400 = vsel %vm390, %v361, -inf
    %401 = vmax.xlane.f32.xlu0 %v400
    %v402 = vpop.xlane.xlu0 %401
    %v403 = vsel %vm390, %v362, -inf
    %404 = vmax.xlane.f32.xlu0 %v403
    %v405 = vpop.xlane.xlu0 %404
    %v406 = vsel %vm390, %v363, -inf
    %407 = vmax.xlane.f32.xlu0 %v406
    %v408 = vpop.xlane.xlu0 %407
    %v409 = vsel %vm390, %v364, -inf
    %410 = vmax.xlane.f32.xlu0 %v409
    %v411 = vpop.xlane.xlu0 %410
    %v412 = vsel %vm390, %v365, -inf
    %413 = vmax.xlane.f32.xlu0 %v412
    %v414 = vpop.xlane.xlu0 %413
    %vm415 = vcmask 7168
    %v416 = vsel %vm415, %v368, %v393
    %v417 = vsel %vm415, %v371, %v396
    %v418 = vsel %vm415, %v374, %v399
    %v419 = vsel %vm415, %v377, %v402
    %v420 = vsel %vm415, %v380, %v405
    %v421 = vsel %vm415, %v383, %v408
    %v422 = vsel %vm415, %v386, %v411
    %v423 = vsel %vm415, %v389, %v414
    %424 = vxpose.xlu0.b32.start [1/16] %v416, 128
    %425 = vxpose.xlu0.b32.cont [2/16] %v417, 128
    %426 = vxpose.xlu0.b32.cont [3/16] %v418, 128
    %427 = vxpose.xlu0.b32.cont [4/16] %v419, 128
    %428 = vxpose.xlu0.b32.cont [5/16] %v420, 128
    %429 = vxpose.xlu0.b32.cont [6/16] %v421, 128
    %430 = vxpose.xlu0.b32.cont [7/16] %v422, 128
    %431 = vxpose.xlu0.b32.cont [8/16] %v423, 128
    %432 = vxpose.xlu0.b32.cont [9/16] 0.0, 128
    %433 = vxpose.xlu0.b32.cont [10/16] 0.0, 128
    %434 = vxpose.xlu0.b32.cont [11/16] 0.0, 128
    %435 = vxpose.xlu0.b32.cont [12/16] 0.0, 128
    %436 = vxpose.xlu0.b32.cont [13/16] 0.0, 128
    %437 = vxpose.xlu0.b32.cont [14/16] 0.0, 128
    %438 = vxpose.xlu0.b32.cont [15/16] 0.0, 128
    %439 = vxpose.xlu0.b32.end [16/16] 0.0, 128
    %v440 = vpop.trf.xlu0
    %v441 = vpop.trf.xlu0
    %v442 = vpop.trf.xlu0
    %v443 = vpop.trf.xlu0
    %v444 = vpop.trf.xlu0
    %v445 = vpop.trf.xlu0
    %v446 = vpop.trf.xlu0
    %v447 = vpop.trf.xlu0
    %v448 = vpop.trf.xlu0
    %v449 = vpop.trf.xlu0
    %v450 = vpop.trf.xlu0
    %v451 = vpop.trf.xlu0
    %v452 = vpop.trf.xlu0
    %v453 = vpop.trf.xlu0
    %v454 = vpop.trf.xlu0
    %v455 = vpop.trf.xlu0
    %v456 = vld [vmem:[#allocation7] sm:$0x1]
    %v457 = vlaneseq
    %v458 = vshrl.u32 %v457, 7
    %v459 = vsub.s32 0, %v458
    %v460 = vrot.slane %v456, %v459
    %v461 = vadd.f32 %v440, %v460
    %v462 = vld [vmem:[#allocation7 + $0x1] sm:$0x1]
    %v463 = vlaneseq
    %v464 = vshrl.u32 %v463, 7
    %v465 = vsub.s32 0, %v464
    %v466 = vrot.slane %v462, %v465
    %v468 = vsel %vm165, %v461, 0
    %470 = vmatprep.subr.mxu0 0.0
    %471 = vmatpush1.msra.mxu0 0.0
    %472 = vmatprep.subr.mxu0 0.0
    %473 = vmatpush1.msra.mxu0 0.0
    %474 = vmatprep.subr.mxu0 0.0
    %475 = vmatpush1.msra.mxu0 0.0
    %476 = vmatprep.subr.mxu0 0.0
    %477 = vmatpush1.msra.mxu0 0.0
    %478 = vmatprep.subr.mxu0 0.0
    %479 = vmatpush1.msra.mxu0 0.0
    %480 = vmatprep.subr.mxu0 0.0
    %481 = vmatpush1.msra.mxu0 0.0
    %482 = vmatprep.subr.mxu0 0.0
    %483 = vmatpush1.msra.mxu0 0.0
    %484 = vmatprep.subr.mxu0 0.0
    %485 = vmatpush1.msra.mxu0 0.0
    %486 = vmatprep.subr.mxu0 0.0
    %487 = vmatpush1.msra.mxu0 %v180
    %488 = vmatprep.subr.mxu0 0.0
    %489 = vmatpush1.msra.mxu0 %v179
    %490 = vmatprep.subr.mxu0 0.0
    %491 = vmatpush1.msra.mxu0 %v178
    %492 = vmatprep.subr.mxu0 0.0
    %493 = vmatpush1.msra.mxu0 %v177
    %494 = vmatprep.subr.mxu0 0.0
    %495 = vmatpush1.msra.mxu0 %v176
    %496 = vmatprep.subr.mxu0 0.0
    %497 = vmatpush1.msra.mxu0 %v175
    %498 = vmatprep.subr.mxu0 0.0
    %499 = vmatpush1.msra.mxu0 %v174
    %500 = vmatprep.subr.mxu0 0.0
    %501 = vmatpush1.msra.mxu0 %v173
    %502 = vmatprep.subr.mxu0 0.0
    %503 = vmatpush2.msra.mxu0 0.0
    %504 = vmatprep.subr.mxu0 0.0
    %505 = vmatpush2.msra.mxu0 0.0
    %506 = vmatprep.subr.mxu0 0.0
    %507 = vmatpush2.msra.mxu0 0.0
    %508 = vmatprep.subr.mxu0 0.0
    %509 = vmatpush2.msra.mxu0 0.0
    %510 = vmatprep.subr.mxu0 0.0
    %511 = vmatpush2.msra.mxu0 0.0
    %512 = vmatprep.subr.mxu0 0.0
    %513 = vmatpush2.msra.mxu0 0.0
    %514 = vmatprep.subr.mxu0 0.0
    %515 = vmatpush2.msra.mxu0 0.0
    %516 = vmatprep.subr.mxu0 0.0
    %517 = vmatpush2.msra.mxu0 0.0
    %518 = vmatprep.subr.mxu0 0.0
    %519 = vmatpush2.msra.mxu0 0.0
    %520 = vmatprep.subr.mxu0 0.0
    %521 = vmatpush2.msra.mxu0 0.0
    %522 = vmatprep.subr.mxu0 0.0
    %523 = vmatpush2.msra.mxu0 0.0
    %524 = vmatprep.subr.mxu0 0.0
    %525 = vmatpush2.msra.mxu0 0.0
    %526 = vmatprep.subr.mxu0 0.0
    %527 = vmatpush2.msra.mxu0 0.0
    %528 = vmatprep.subr.mxu0 0.0
    %529 = vmatpush2.msra.mxu0 0.0
    %530 = vmatprep.subr.mxu0 0.0
    %531 = vmatpush2.msra.mxu0 0.0
    %532 = vmatprep.subr.mxu0 0.0
    %533 = vmatpush2.msra.mxu0 0.0
    %534 = vmatprep.mubr.f32.mxu0 0.0
    %535 = vmatmul.mubr.f32.gmra.mxu0 %v468
    %v536 = vpop.f32.mrf.mxu0
    %v537 = vadd.f32 %v466, %v536
    %v538 = vpop.f32.mrf.mxu0
    %539 = vdwg.mxu0
    %v540 = vmax.f32 %v537, 0.0
    %v541 = vld [vmem:[#allocation5 + $0x40] sm:$0xff]
    %v542 = vld [vmem:[#allocation5 + $0x48] sm:$0xff]
    %v543 = vld [vmem:[#allocation5 + $0x50] sm:$0xff]
    %v544 = vld [vmem:[#allocation5 + $0x58] sm:$0xff]
    %v545 = vld [vmem:[#allocation5 + $0x60] sm:$0xff]
    %v546 = vld [vmem:[#allocation5 + $0x68] sm:$0xff]
    %v547 = vld [vmem:[#allocation5 + $0x70] sm:$0xff]
    %v548 = vld [vmem:[#allocation7 + $0x2] sm:$0x1]
    %v549 = vlaneseq
    %v550 = vshrl.u32 %v549, 7
    %v551 = vsub.s32 0, %v550
    %v552 = vrot.slane %v548, %v551
    %vm553 = vcmask 457728
    %v555 = vsel %vm553, %v540, 0
    %557 = vmatprep.subr.mxu0 0.0
    %558 = vmatpush1.msra.mxu0 0.0
    %559 = vmatprep.subr.mxu0 0.0
    %560 = vmatpush1.msra.mxu0 0.0
    %561 = vmatprep.subr.mxu0 0.0
    %562 = vmatpush1.msra.mxu0 0.0
    %563 = vmatprep.subr.mxu0 0.0
    %564 = vmatpush1.msra.mxu0 0.0
    %565 = vmatprep.subr.mxu0 0.0
    %566 = vmatpush1.msra.mxu0 0.0
    %567 = vmatprep.subr.mxu0 0.0
    %568 = vmatpush1.msra.mxu0 0.0
    %569 = vmatprep.subr.mxu0 0.0
    %570 = vmatpush1.msra.mxu0 0.0
    %571 = vmatprep.subr.mxu0 0.0
    %572 = vmatpush1.msra.mxu0 0.0
    %573 = vmatprep.subr.mxu0 0.0
    %574 = vmatpush1.msra.mxu0 0.0
    %575 = vmatprep.subr.mxu0 0.0
    %576 = vmatpush1.msra.mxu0 %v547
    %577 = vmatprep.subr.mxu0 0.0
    %578 = vmatpush1.msra.mxu0 %v546
    %579 = vmatprep.subr.mxu0 0.0
    %580 = vmatpush1.msra.mxu0 %v545
    %581 = vmatprep.subr.mxu0 0.0
    %582 = vmatpush1.msra.mxu0 %v544
    %583 = vmatprep.subr.mxu0 0.0
    %584 = vmatpush1.msra.mxu0 %v543
    %585 = vmatprep.subr.mxu0 0.0
    %586 = vmatpush1.msra.mxu0 %v542
    %587 = vmatprep.subr.mxu0 0.0
    %588 = vmatpush1.msra.mxu0 %v541
    %589 = vmatprep.subr.mxu0 0.0
    %590 = vmatpush2.msra.mxu0 0.0
    %591 = vmatprep.subr.mxu0 0.0
    %592 = vmatpush2.msra.mxu0 0.0
    %593 = vmatprep.subr.mxu0 0.0
    %594 = vmatpush2.msra.mxu0 0.0
    %595 = vmatprep.subr.mxu0 0.0
    %596 = vmatpush2.msra.mxu0 0.0
    %597 = vmatprep.subr.mxu0 0.0
    %598 = vmatpush2.msra.mxu0 0.0
    %599 = vmatprep.subr.mxu0 0.0
    %600 = vmatpush2.msra.mxu0 0.0
    %601 = vmatprep.subr.mxu0 0.0
    %602 = vmatpush2.msra.mxu0 0.0
    %603 = vmatprep.subr.mxu0 0.0
    %604 = vmatpush2.msra.mxu0 0.0
    %605 = vmatprep.subr.mxu0 0.0
    %606 = vmatpush2.msra.mxu0 0.0
    %607 = vmatprep.subr.mxu0 0.0
    %608 = vmatpush2.msra.mxu0 0.0
    %609 = vmatprep.subr.mxu0 0.0
    %610 = vmatpush2.msra.mxu0 0.0
    %611 = vmatprep.subr.mxu0 0.0
    %612 = vmatpush2.msra.mxu0 0.0
    %613 = vmatprep.subr.mxu0 0.0
    %614 = vmatpush2.msra.mxu0 0.0
    %615 = vmatprep.subr.mxu0 0.0
    %616 = vmatpush2.msra.mxu0 0.0
    %617 = vmatprep.subr.mxu0 0.0
    %618 = vmatpush2.msra.mxu0 0.0
    %619 = vmatprep.subr.mxu0 0.0
    %620 = vmatpush2.msra.mxu0 0.0
    %621 = vmatprep.mubr.f32.mxu0 0.0
    %622 = vmatmul.mubr.f32.gmra.mxu0 %v555
    %v623 = vpop.f32.mrf.mxu0
    %v624 = vadd.f32 %v552, %v623
    %v625 = vpop.f32.mrf.mxu0
    %626 = vdwg.mxu0
    %v627 = vmax.f32 %v624, 0.0
    %v628 = vld [vmem:[#allocation5 + $0x40] sm:$0xff]
    %v629 = vld [vmem:[#allocation5 + $0x48] sm:$0xff]
    %v630 = vld [vmem:[#allocation5 + $0x50] sm:$0xff]
    %v631 = vld [vmem:[#allocation5 + $0x58] sm:$0xff]
    %v632 = vld [vmem:[#allocation5 + $0x60] sm:$0xff]
    %v633 = vld [vmem:[#allocation7 + $0x3] sm:$0x1]
    %v634 = vlaneseq
    %v635 = vshrl.u32 %v634, 7
    %v636 = vsub.s32 0, %v635
    %v637 = vrot.slane %v633, %v636
    %643 = vrot.lane.b32.xlu0 %v628, 64
    %v644 = vpop.permute.xlu0 %643
    %645 = vrot.lane.b32.xlu0 %v629, 64
    %v646 = vpop.permute.xlu0 %645
    %647 = vrot.lane.b32.xlu0 %v630, 64
    %v648 = vpop.permute.xlu0 %647
    %649 = vrot.lane.b32.xlu0 %v631, 64
    %v650 = vpop.permute.xlu0 %649
    %651 = vrot.lane.b32.xlu0 %v632, 64
    %v652 = vpop.permute.xlu0 %651
    %vm658 = vcmask 326656
    %v660 = vsel %vm658, %v627, 0
    %662 = vmatprep.subr.mxu0 0.0
    %663 = vmatpush1.msra.mxu0 0.0
    %664 = vmatprep.subr.mxu0 0.0
    %665 = vmatpush1.msra.mxu0 0.0
    %666 = vmatprep.subr.mxu0 0.0
    %667 = vmatpush1.msra.mxu0 0.0
    %668 = vmatprep.subr.mxu0 0.0
    %669 = vmatpush1.msra.mxu0 0.0
    %670 = vmatprep.subr.mxu0 0.0
    %671 = vmatpush1.msra.mxu0 0.0
    %672 = vmatprep.subr.mxu0 0.0
    %673 = vmatpush1.msra.mxu0 0.0
    %674 = vmatprep.subr.mxu0 0.0
    %675 = vmatpush1.msra.mxu0 0.0
    %676 = vmatprep.subr.mxu0 0.0
    %677 = vmatpush1.msra.mxu0 0.0
    %678 = vmatprep.subr.mxu0 0.0
    %679 = vmatpush1.msra.mxu0 0.0
    %680 = vmatprep.subr.mxu0 0.0
    %681 = vmatpush1.msra.mxu0 0.0
    %682 = vmatprep.subr.mxu0 0.0
    %683 = vmatpush1.msra.mxu0 0.0
    %684 = vmatprep.subr.mxu0 0.0
    %685 = vmatpush1.msra.mxu0 %v652
    %686 = vmatprep.subr.mxu0 0.0
    %687 = vmatpush1.msra.mxu0 %v650
    %688 = vmatprep.subr.mxu0 0.0
    %689 = vmatpush1.msra.mxu0 %v648
    %690 = vmatprep.subr.mxu0 0.0
    %691 = vmatpush1.msra.mxu0 %v646
    %692 = vmatprep.subr.mxu0 0.0
    %693 = vmatpush1.msra.mxu0 %v644
    %694 = vmatprep.subr.mxu0 0.0
    %695 = vmatpush2.msra.mxu0 0.0
    %696 = vmatprep.subr.mxu0 0.0
    %697 = vmatpush2.msra.mxu0 0.0
    %698 = vmatprep.subr.mxu0 0.0
    %699 = vmatpush2.msra.mxu0 0.0
    %700 = vmatprep.subr.mxu0 0.0
    %701 = vmatpush2.msra.mxu0 0.0
    %702 = vmatprep.subr.mxu0 0.0
    %703 = vmatpush2.msra.mxu0 0.0
    %704 = vmatprep.subr.mxu0 0.0
    %705 = vmatpush2.msra.mxu0 0.0
    %706 = vmatprep.subr.mxu0 0.0
    %707 = vmatpush2.msra.mxu0 0.0
    %708 = vmatprep.subr.mxu0 0.0
    %709 = vmatpush2.msra.mxu0 0.0
    %710 = vmatprep.subr.mxu0 0.0
    %711 = vmatpush2.msra.mxu0 0.0
    %712 = vmatprep.subr.mxu0 0.0
    %713 = vmatpush2.msra.mxu0 0.0
    %714 = vmatprep.subr.mxu0 0.0
    %715 = vmatpush2.msra.mxu0 0.0
    %716 = vmatprep.subr.mxu0 0.0
    %717 = vmatpush2.msra.mxu0 0.0
    %718 = vmatprep.subr.mxu0 0.0
    %719 = vmatpush2.msra.mxu0 0.0
    %720 = vmatprep.subr.mxu0 0.0
    %721 = vmatpush2.msra.mxu0 0.0
    %722 = vmatprep.subr.mxu0 0.0
    %723 = vmatpush2.msra.mxu0 0.0
    %724 = vmatprep.subr.mxu0 0.0
    %725 = vmatpush2.msra.mxu0 0.0
    %726 = vmatprep.mubr.f32.mxu0 0.0
    %727 = vmatmul.mubr.f32.gmra.mxu0 %v660
    %v728 = vpop.f32.mrf.mxu0
    %v729 = vadd.f32 %v637, %v728
    %v730 = vpop.f32.mrf.mxu0
    %731 = vdwg.mxu0
    %v732 = vmax.f32 %v729, 0.0
    %v733 = vld [vmem:[#allocation5 + $0x78] sm:$0xff]
    %v734 = vld [vmem:[#allocation5 + $0x80] sm:$0xff]
    %v735 = vld [vmem:[#allocation5 + $0x88] sm:$0xff]
    %v736 = vld [vmem:[#allocation5 + $0x90] sm:$0xff]
    %v737 = vld [vmem:[#allocation7 + $0x4] sm:$0x1]
    %v738 = vlaneseq
    %v739 = vshrl.u32 %v738, 7
    %v740 = vsub.s32 0, %v739
    %v741 = vrot.slane %v737, %v740
    %v743 = vsel %vm161, %v732, 0
    %745 = vmatprep.subr.mxu0 0.0
    %746 = vmatpush1.msra.mxu0 0.0
    %747 = vmatprep.subr.mxu0 0.0
    %748 = vmatpush1.msra.mxu0 0.0
    %749 = vmatprep.subr.mxu0 0.0
    %750 = vmatpush1.msra.mxu0 0.0
    %751 = vmatprep.subr.mxu0 0.0
    %752 = vmatpush1.msra.mxu0 0.0
    %753 = vmatprep.subr.mxu0 0.0
    %754 = vmatpush1.msra.mxu0 0.0
    %755 = vmatprep.subr.mxu0 0.0
    %756 = vmatpush1.msra.mxu0 0.0
    %757 = vmatprep.subr.mxu0 0.0
    %758 = vmatpush1.msra.mxu0 0.0
    %759 = vmatprep.subr.mxu0 0.0
    %760 = vmatpush1.msra.mxu0 0.0
    %761 = vmatprep.subr.mxu0 0.0
    %762 = vmatpush1.msra.mxu0 0.0
    %763 = vmatprep.subr.mxu0 0.0
    %764 = vmatpush1.msra.mxu0 0.0
    %765 = vmatprep.subr.mxu0 0.0
    %766 = vmatpush1.msra.mxu0 0.0
    %767 = vmatprep.subr.mxu0 0.0
    %768 = vmatpush1.msra.mxu0 0.0
    %769 = vmatprep.subr.mxu0 0.0
    %770 = vmatpush1.msra.mxu0 %v736
    %771 = vmatprep.subr.mxu0 0.0
    %772 = vmatpush1.msra.mxu0 %v735
    %773 = vmatprep.subr.mxu0 0.0
    %774 = vmatpush1.msra.mxu0 %v734
    %775 = vmatprep.subr.mxu0 0.0
    %776 = vmatpush1.msra.mxu0 %v733
    %777 = vmatprep.subr.mxu0 0.0
    %778 = vmatpush2.msra.mxu0 0.0
    %779 = vmatprep.subr.mxu0 0.0
    %780 = vmatpush2.msra.mxu0 0.0
    %781 = vmatprep.subr.mxu0 0.0
    %782 = vmatpush2.msra.mxu0 0.0
    %783 = vmatprep.subr.mxu0 0.0
    %784 = vmatpush2.msra.mxu0 0.0
    %785 = vmatprep.subr.mxu0 0.0
    %786 = vmatpush2.msra.mxu0 0.0
    %787 = vmatprep.subr.mxu0 0.0
    %788 = vmatpush2.msra.mxu0 0.0
    %789 = vmatprep.subr.mxu0 0.0
    %790 = vmatpush2.msra.mxu0 0.0
    %791 = vmatprep.subr.mxu0 0.0
    %792 = vmatpush2.msra.mxu0 0.0
    %793 = vmatprep.subr.mxu0 0.0
    %794 = vmatpush2.msra.mxu0 0.0
    %795 = vmatprep.subr.mxu0 0.0
    %796 = vmatpush2.msra.mxu0 0.0
    %797 = vmatprep.subr.mxu0 0.0
    %798 = vmatpush2.msra.mxu0 0.0
    %799 = vmatprep.subr.mxu0 0.0
    %800 = vmatpush2.msra.mxu0 0.0
    %801 = vmatprep.subr.mxu0 0.0
    %802 = vmatpush2.msra.mxu0 0.0
    %803 = vmatprep.subr.mxu0 0.0
    %804 = vmatpush2.msra.mxu0 0.0
    %805 = vmatprep.subr.mxu0 0.0
    %806 = vmatpush2.msra.mxu0 0.0
    %807 = vmatprep.subr.mxu0 0.0
    %808 = vmatpush2.msra.mxu0 0.0
    %809 = vmatprep.mubr.f32.mxu0 0.0
    %810 = vmatmul.mubr.f32.gmra.mxu0 %v743
    %v811 = vpop.f32.mrf.mxu0
    %v812 = vadd.f32 %v741, %v811
    %v813 = vpop.f32.mrf.mxu0
    %814 = vdwg.mxu0
    %vm815 = vcmask 132096
    %816 = vst.msk [vmem:[#allocation8] sm:$0x3] %vm815, %v812
    // Predicated region
    $region26: #{tpu_custom_call.1} parent=1 // pred_check
      _
    $region27: #{tpu_custom_call.1} parent=1 // pred_check_branch
      %818 = sbr.rel (0) target = $region29
    $region28: #{tpu_custom_call.1} parent=1 // pred_region
      %s820 = ssub.s32 32, 32
      %821 = vsyncadd [#allocation4], %s820
      %s823 = sshll.u32 [#allocation8], 4
      %s824 = int_to_ptr.vmem [resolvable:$true] %s823
      %826 = dma.vmem_to_hbm [thread:$0]  %s824, 32, %s3, [#allocation4]
    $region29: #{tpu_custom_call.1} parent=1 // pred_fallthru
      _
    // Predicated region
    $region30: #{tpu_custom_call.1} parent=1 // pred_check
      _
    $region31: #{tpu_custom_call.1} parent=1 // pred_check_branch
      %828 = sbr.rel (0) target = $region33
    $region32: #{tpu_custom_call.1} parent=1 // pred_region
      %829 = dma.done [#allocation4], 32
    $region33: #{tpu_custom_call.1} parent=1 // pred_fallthru
      _
    %830 = vsyncpa [#allocation3], 1
    %831 = vsyncpa [#allocation6], 1
    %832 = vsyncpa [#allocation4], 1

</llo_original>
